<compile_context>
chip_gen: v7x
topology: tpu7x:2x2x1
jax: 0.10.0
libtpu: 0.0.40
codegen_flags: <defaults>
</compile_context>

<pallas_src>
import functools

import numpy as np
import jax
import jax.numpy as jnp
from jax import lax
from jax.experimental import pallas as pl
from jax.experimental.pallas import tpu as pltpu


def _round_up(x, m):
    return ((x + m - 1) // m) * m


# --------------------------------------------------------------------------------------
# Embedding kernel: y = x @ W + b, with elem_weights folded into the last column.
# --------------------------------------------------------------------------------------
def _embed_kernel(x_ref, w_ref, b_ref, wts_ref, o_ref):
    y = jnp.dot(x_ref[...], w_ref[...], preferred_element_type=jnp.float32) + b_ref[...]
    f = o_ref.shape[1]
    last_col = (lax.broadcasted_iota(jnp.int32, (1, f), 1) == (f - 1)).astype(jnp.float32)
    o_ref[...] = y + wts_ref[...] * last_col


def embed_with_weights(x, w_pad, b_pad, wts):
    """out[:, :F-1] = x @ W + b ; out[:, F-1] = elem_weights (done in-kernel)."""
    n = x.shape[0]
    f = w_pad.shape[1]
    return pl.pallas_call(
        _embed_kernel,
        grid=(1,),
        in_specs=[
            pl.BlockSpec(x.shape, lambda i: (0, 0)),
            pl.BlockSpec(w_pad.shape, lambda i: (0, 0)),
            pl.BlockSpec(b_pad.shape, lambda i: (0, 0)),
            pl.BlockSpec(wts.shape, lambda i: (0, 0)),
        ],
        out_specs=pl.BlockSpec((n, f), lambda i: (0, 0)),
        out_shape=jax.ShapeDtypeStruct((n, f), jnp.float32),
        compiler_params=pltpu.CompilerParams(
            dimension_semantics=("arbitrary",),
            vmem_limit_bytes=64 * 1024 * 1024),
    )(x.astype(jnp.bfloat16), w_pad, b_pad, wts)


# --------------------------------------------------------------------------------------
# Fused all-heads WeightedAttentionPooling kernel (M-tiled, online segment softmax).
# --------------------------------------------------------------------------------------
def _pooling_kernel(heads, fea_len, weight_pow,
                    fea_ref, wts_ref, idx_ref,
                    gw1_ref, gb1_ref, gw2_ref, gb2_ref,
                    mw1_ref, mb1_ref, mw2_ref, mb2_ref,
                    res_ref, out_ref,
                    m_sc, l_sc, acc_sc):
    t = pl.program_id(0)
    n_seg = out_ref.shape[0]
    tm = fea_ref.shape[0]
    f = fea_len

    @pl.when(t == 0)
    def _init():
        m_sc[...] = jnp.full(m_sc.shape, -1e30, jnp.float32)
        l_sc[...] = jnp.zeros(l_sc.shape, jnp.float32)
        acc_sc[...] = jnp.zeros(acc_sc.shape, jnp.float32)

    fea = fea_ref[...]                                    # (tm, Din)  bf16
    wts = wts_ref[...]                                    # (tm, 1)    f32
    idx = idx_ref[...]                                    # (tm, 1)    int32

    # Segment membership built in-kernel; padded rows carry idx == -1 -> all-zero row.
    seg_ids = lax.broadcasted_iota(jnp.int32, (tm, n_seg), 1)
    member = idx == seg_ids                               # (tm, n_seg) bool
    oh = member.astype(jnp.bfloat16)
    valid = idx >= 0                                      # (tm, 1) bool

    # Gate SimpleNetworks, all heads packed on lanes: gate (tm, heads) in f32.
    gh = jnp.dot(fea, gw1_ref[...], preferred_element_type=jnp.float32) + gb1_ref[...]
    gh = gh * jax.nn.sigmoid(gh)                          # SiLU (f32)
    gate = jnp.dot(gh.astype(jnp.bfloat16), gw2_ref[...],
                   preferred_element_type=jnp.float32) + gb2_ref[...]

    # Message SimpleNetworks, all heads packed on lanes: msg (tm, heads*F) in f32.
    mh = jnp.dot(fea, mw1_ref[...], preferred_element_type=jnp.float32) + mb1_ref[...]
    mh = mh * jax.nn.sigmoid(mh)
    msg = jnp.dot(mh.astype(jnp.bfloat16), mw2_ref[...],
                  preferred_element_type=jnp.float32) + mb2_ref[...]

    # Flash-style running softmax shift (per-head global max; the shift cancels in acc/l).
    m_old = m_sc[...]                                     # (1, heads)
    tile_max = jnp.max(jnp.where(valid, gate, -1e30), axis=0, keepdims=True)
    m_new = jnp.maximum(m_old, tile_max)
    rescale = jnp.exp(m_old - m_new)                      # (1, heads)
    m_sc[...] = m_new

    if weight_pow == 1.0:                                 # trace-time fast path
        w_pow = wts
    else:
        w_pow = jnp.power(wts, weight_pow)
    p = w_pow * jnp.exp(gate - m_new)                     # (tm, heads) f32

    # Denominator:  l[s, h] += sum_m oh[m, s] * p[m, h]
    l_sc[...] = l_sc[...] * rescale + jnp.einsum(
        "ms,mh->sh", oh, p.astype(jnp.bfloat16), preferred_element_type=jnp.float32)

    # Numerator:    acc[s, h*F + j] += sum_m oh[m, s] * p[m, h] * msg[m, h*F + j]
    p_rep = jnp.concatenate(
        [jnp.broadcast_to(p[:, h:h + 1], (tm, f)) for h in range(heads)], axis=1)
    rescale_rep = jnp.concatenate(
        [jnp.broadcast_to(rescale[:, h:h + 1], (1, f)) for h in range(heads)], axis=1)
    weighted = (p_rep * msg).astype(jnp.bfloat16)
    acc_sc[...] = acc_sc[...] * rescale_rep + jnp.einsum(
        "ms,mk->sk", oh, weighted, preferred_element_type=jnp.float32)

    @pl.when(t == pl.num_programs(0) - 1)
    def _finalize():
        l = l_sc[...]
        denom = jnp.concatenate(
            [jnp.broadcast_to(l[:, h:h + 1], (n_seg, f)) for h in range(heads)], axis=1)
        pooled = acc_sc[...] / (denom + 1e-10)            # (n_seg, heads*F)
        mean = pooled[:, 0:f]
        for h in range(1, heads):
            mean = mean + pooled[:, h * f:(h + 1) * f]
        mean = mean * (1.0 / heads)
        out_ref[...] = (mean + res_ref[...]).astype(out_ref.dtype)


def fused_attention_pool(fea, wts, idx, residual, packed, *, heads, fea_len,
                         weight_pow, n_seg, tile_m):
    """All heads of one WeightedAttentionPooling layer (+ head mean + residual)."""
    assert tile_m % 8 == 0
    m, din = fea.shape
    tile_m = min(tile_m, _round_up(m, 8))
    mp = _round_up(m, tile_m)
    pad = mp - m

    fea_p = jnp.pad(fea, ((0, pad), (0, 0))).astype(jnp.bfloat16)
    wts_p = jnp.pad(wts, ((0, pad), (0, 0)), constant_values=1.0)
    idx_p = jnp.pad(idx.reshape(-1, 1).astype(jnp.int32), ((0, pad), (0, 0)),
                    constant_values=-1)

    data_specs = [
        pl.BlockSpec((tile_m, din), lambda i: (i, 0)),
        pl.BlockSpec((tile_m, 1), lambda i: (i, 0)),
        pl.BlockSpec((tile_m, 1), lambda i: (i, 0)),
    ]
    weight_specs = [pl.BlockSpec(p.shape, lambda i: (0, 0)) for p in packed]
    res_spec = [pl.BlockSpec((n_seg, fea_len), lambda i: (0, 0))]

    return pl.pallas_call(
        functools.partial(_pooling_kernel, heads, fea_len, float(weight_pow)),
        grid=(mp // tile_m,),
        in_specs=data_specs + weight_specs + res_spec,
        out_specs=pl.BlockSpec((n_seg, fea_len), lambda i: (0, 0)),
        out_shape=jax.ShapeDtypeStruct((n_seg, fea_len), jnp.float32),
        scratch_shapes=[
            pltpu.VMEM((1, heads), jnp.float32),               # running max
            pltpu.VMEM((n_seg, heads), jnp.float32),           # running denominator
            pltpu.VMEM((n_seg, heads * fea_len), jnp.float32), # running numerator
        ],
        compiler_params=pltpu.CompilerParams(
            dimension_semantics=("arbitrary",),
            vmem_limit_bytes=64 * 1024 * 1024),
    )(fea_p, wts_p, idx_p, *packed, residual)


# --------------------------------------------------------------------------------------
# Parameters (deterministic synthetic init) + packing + model glue
# --------------------------------------------------------------------------------------
def _init_linear(key, din, dout, scale=0.1):
    kw, kb = jax.random.split(key)
    w = scale * jax.random.normal(kw, (din, dout), jnp.float32)
    b = scale * jax.random.normal(kb, (1, dout), jnp.float32)
    return w, b


def _init_head(key, din, gate_hidden, msg_hidden, fea_out):
    """Params for one WeightedAttentionPooling head (gate_nn + message_nn)."""
    k1, k2, k3, k4 = jax.random.split(key, 4)
    gw1, gb1 = _init_linear(k1, din, gate_hidden)
    gw2, gb2 = _init_linear(k2, gate_hidden, 1)
    mw1, mb1 = _init_linear(k3, din, msg_hidden)
    mw2, mb2 = _init_linear(k4, msg_hidden, fea_out)
    return (gw1, gb1, gw2, gb2, mw1, mb1, mw2, mb2)


def _block_diag(mats):
    rows = sum(m.shape[0] for m in mats)
    cols = sum(m.shape[1] for m in mats)
    out = jnp.zeros((rows, cols), jnp.float32)
    r = c = 0
    for m in mats:
        out = out.at[r:r + m.shape[0], c:c + m.shape[1]].set(m)
        r += m.shape[0]
        c += m.shape[1]
    return out


def _pack_heads(head_params):
    """Pack per-head SimpleNetwork weights lane-dense for the fused kernel (bf16 MXU)."""
    gw1 = jnp.concatenate([p[0] for p in head_params], axis=1).astype(jnp.bfloat16)
    gb1 = jnp.concatenate([p[1] for p in head_params], axis=1)
    gw2 = _block_diag([p[2] for p in head_params]).astype(jnp.bfloat16)
    gb2 = jnp.concatenate([p[3] for p in head_params], axis=1)
    mw1 = jnp.concatenate([p[4] for p in head_params], axis=1).astype(jnp.bfloat16)
    mb1 = jnp.concatenate([p[5] for p in head_params], axis=1)
    mw2 = _block_diag([p[6] for p in head_params]).astype(jnp.bfloat16)
    mb2 = jnp.concatenate([p[7] for p in head_params], axis=1)
    return (gw1, gb1, gw2, gb2, mw1, mb1, mw2, mb2)


class DescriptorNetworkPallas:
    def __init__(self, key, elem_emb_len, elem_fea_len=32, n_graph=2, elem_heads=2,
                 elem_gate=32, elem_msg=32, cry_heads=2, cry_gate=32, cry_msg=32,
                 weight_pow=1.0, tile_m=256):
        self.elem_fea_len = elem_fea_len
        self.elem_heads = elem_heads
        self.n_cry_heads = cry_heads
        self.weight_pow = float(weight_pow)
        self.tile_m = tile_m

        keys = jax.random.split(key, 1 + n_graph * elem_heads + cry_heads)
        self.emb_w, self.emb_b = _init_linear(keys[0], elem_emb_len, elem_fea_len - 1)
        # Folded full-width embedding weight/bias (last column zero -> filled with weights).
        self.emb_w_pad = jnp.concatenate(
            [self.emb_w, jnp.zeros((elem_emb_len, 1), jnp.float32)], axis=1
        ).astype(jnp.bfloat16)
        self.emb_b_pad = jnp.concatenate(
            [self.emb_b, jnp.zeros((1, 1), jnp.float32)], axis=1)

        ki = 1
        self.graph_heads = []      # per-layer list of per-head f32 params (reference)
        self.graph_packed = []     # per-layer packed bf16 params (kernel)
        for _ in range(n_graph):
            heads = []
            for _ in range(elem_heads):
                heads.append(_init_head(keys[ki], 2 * elem_fea_len, elem_gate,
                                        elem_msg, elem_fea_len))
                ki += 1
            self.graph_heads.append(heads)
            self.graph_packed.append(_pack_heads(heads))

        self.cry_heads_params = []
        for _ in range(cry_heads):
            self.cry_heads_params.append(
                _init_head(keys[ki], elem_fea_len, cry_gate, cry_msg, elem_fea_len))
            ki += 1
        self.cry_packed = _pack_heads(self.cry_heads_params)

    def __call__(self, elem_weights, elem_fea, self_fea_idx, nbr_fea_idx,
                 cry_elem_idx, n_cry):
        n = elem_fea.shape[0]
        x = embed_with_weights(elem_fea, self.emb_w_pad, self.emb_b_pad, elem_weights)
        nbr_w = elem_weights[nbr_fea_idx]

        # Message-passing layers: one fused pallas_call per layer (all heads + residual).
        for packed in self.graph_packed:
            fea = jnp.concatenate([x[self_fea_idx], x[nbr_fea_idx]], axis=1)
            x = fused_attention_pool(
                fea, nbr_w, self_fea_idx, x, packed,
                heads=self.elem_heads, fea_len=self.elem_fea_len,
                weight_pow=self.weight_pow, n_seg=n, tile_m=self.tile_m)

        # Crystal-level pooling: one fused pallas_call for all crystal heads (no residual).
        zero_res = jnp.zeros((n_cry, self.elem_fea_len), jnp.float32)
        cry_fea = fused_attention_pool(
            x, elem_weights, cry_elem_idx, zero_res, self.cry_packed,
            heads=self.n_cry_heads, fea_len=self.elem_fea_len,
            weight_pow=self.weight_pow, n_seg=n_cry, tile_m=self.tile_m)
        return cry_fea, x


# --------------------------------------------------------------------------------------
# Pure-JAX f32 reference (mirrors the PyTorch forward semantics) for validation
# --------------------------------------------------------------------------------------
def _ref_simple_net(x, w1, b1, w2, b2):
    h = x @ w1 + b1
    h = h * jax.nn.sigmoid(h)
    return h @ w2 + b2


def _ref_attn_head(fea, wts, index, nseg, p, weight_pow):
    gw1, gb1, gw2, gb2, mw1, mb1, mw2, mb2 = p
    gate = _ref_simple_net(fea, gw1, gb1, gw2, gb2)
    seg_max = jax.ops.segment_max(gate, index, num_segments=nseg)
    gate = gate - seg_max[index]
    gate = (wts ** weight_pow) * jnp.exp(gate)
    denom = jax.ops.segment_sum(gate, index, num_segments=nseg)
    gate = gate / (denom[index] + 1e-10)
    msg = _ref_simple_net(fea, mw1, mb1, mw2, mb2)
    return jax.ops.segment_sum(gate * msg, index, num_segments=nseg)


def _ref_forward(model, elem_weights, elem_fea, self_fea_idx, nbr_fea_idx,
                 cry_elem_idx, n_cry):
    x = elem_fea @ model.emb_w + model.emb_b
    x = jnp.concatenate([x, elem_weights], axis=1)
    n = x.shape[0]
    nbr_w = elem_weights[nbr_fea_idx]
    for heads in model.graph_heads:
        fea = jnp.concatenate([x[self_fea_idx], x[nbr_fea_idx]], axis=1)
        hout = [_ref_attn_head(fea, nbr_w, self_fea_idx, n, hp, model.weight_pow)
                for hp in heads]
        x = jnp.mean(jnp.stack(hout), axis=0) + x
    hout = [_ref_attn_head(x, elem_weights, cry_elem_idx, n_cry, hp, model.weight_pow)
            for hp in model.cry_heads_params]
    return jnp.mean(jnp.stack(hout), axis=0), x


# --------------------------------------------------------------------------------------
if __name__ == "__main__":
    key = jax.random.PRNGKey(0)
    k_model, k_fea, k_w = jax.random.split(key, 3)

    elem_emb_len = 16
    elem_fea_len = 32
    n_graph = 2
    elem_heads = 2
    cry_heads = 2
    hidden = 32

    # Synthetic batch: 3 crystals with 3/4/3 elements -> N=10 nodes;
    # edges are all (i, j) pairs within a crystal (incl. self) -> M=34.
    crystal_sizes = [3, 4, 3]
    cry_elem_idx, self_fea_idx, nbr_fea_idx = [], [], []
    offset = 0
    for c, sz in enumerate(crystal_sizes):
        cry_elem_idx += [c] * sz
        for i in range(sz):
            for j in range(sz):
                self_fea_idx.append(offset + i)
                nbr_fea_idx.append(offset + j)
        offset += sz
    n_elem = offset
    n_cry = len(crystal_sizes)

    cry_elem_idx = jnp.asarray(cry_elem_idx, jnp.int32)
    self_fea_idx = jnp.asarray(self_fea_idx, jnp.int32)
    nbr_fea_idx = jnp.asarray(nbr_fea_idx, jnp.int32)

    elem_fea = jax.random.normal(k_fea, (n_elem, elem_emb_len), jnp.float32)
    raw_w = jax.random.uniform(k_w, (n_elem, 1), jnp.float32, 0.1, 1.0)
    seg_tot = jax.ops.segment_sum(raw_w, cry_elem_idx, num_segments=n_cry)
    elem_weights = raw_w / seg_tot[cry_elem_idx]        # fractional weights per crystal

    # tile_m=16 -> the edge pooling runs a 3-step M-tiled grid (exercises the online
    # softmax / accumulator path); production would use tile_m ~ 256-512.
    model = DescriptorNetworkPallas(
        k_model, elem_emb_len, elem_fea_len=elem_fea_len, n_graph=n_graph,
        elem_heads=elem_heads, elem_gate=hidden, elem_msg=hidden,
        cry_heads=cry_heads, cry_gate=hidden, cry_msg=hidden,
        weight_pow=1.0, tile_m=16)

    cry_fea, elem_out = model(elem_weights, elem_fea, self_fea_idx, nbr_fea_idx,
                              cry_elem_idx, n_cry)
    jax.block_until_ready((cry_fea, elem_out))

    ref_cry, ref_elem = _ref_forward(model, elem_weights, elem_fea, self_fea_idx,
                                     nbr_fea_idx, cry_elem_idx, n_cry)

    assert cry_fea.shape == (n_cry, elem_fea_len)
    assert elem_out.shape == (n_elem, elem_fea_len)
    # Kernel uses bf16 on the MXU path (f32 accumulation); reference is pure f32,
    # so compare with a bf16-appropriate tolerance.
    np.testing.assert_allclose(np.asarray(cry_fea), np.asarray(ref_cry),
                               rtol=5e-2, atol=5e-2)
    np.testing.assert_allclose(np.asarray(elem_out), np.asarray(ref_elem),
                               rtol=5e-2, atol=5e-2)
    print("KERNEL_OK")
</pallas_src>

<mosaic_0001>
module attributes {stable_mosaic.version = 11 : i64} {
  func.func @_embed_kernel(%arg0: i32, %arg1: memref<10x16xbf16, #tpu.memory_space<vmem>>, %arg2: memref<16x32xbf16, #tpu.memory_space<vmem>>, %arg3: memref<1x32xf32, #tpu.memory_space<vmem>>, %arg4: memref<10x1xf32, #tpu.memory_space<vmem>>, %arg5: memref<10x32xf32, #tpu.memory_space<vmem>>) attributes {dimension_semantics = [#tpu.dimension_semantics<arbitrary>], iteration_bounds = array<i64: 1>, scalar_prefetch = 0 : i64, scratch_operands = 0 : i64, tpu.core_type = #tpu.core_type<tc>, window_params = [{pipeline_mode = #tpu.pipeline_mode<synchronous>, transform_indices = @transform_0, window_bounds = array<i64: 10, 16>}, {pipeline_mode = #tpu.pipeline_mode<synchronous>, transform_indices = @transform_1, window_bounds = array<i64: 16, 32>}, {pipeline_mode = #tpu.pipeline_mode<synchronous>, transform_indices = @transform_2, window_bounds = array<i64: 1, 32>}, {pipeline_mode = #tpu.pipeline_mode<synchronous>, transform_indices = @transform_3, window_bounds = array<i64: 10, 1>}, {pipeline_mode = #tpu.pipeline_mode<synchronous>, transform_indices = @transform_4, window_bounds = array<i64: 10, 32>}]} {
    %c0 = arith.constant 0 : index
    %c0_0 = arith.constant 0 : index
    %0 = vector.load %arg1[%c0, %c0_0] : memref<10x16xbf16, #tpu.memory_space<vmem>>, vector<10x16xbf16>
    %c0_1 = arith.constant 0 : index
    %c0_2 = arith.constant 0 : index
    %1 = vector.load %arg2[%c0_1, %c0_2] : memref<16x32xbf16, #tpu.memory_space<vmem>>, vector<16x32xbf16>
    %cst = arith.constant dense<0.000000e+00> : vector<10x32xf32>
    %2 = tpu.matmul %0, %1, %cst {dimension_numbers = #tpu.dot_dimension_numbers<[1], [0], [0], [1], [0, 0, 1, 1], [], []>} : vector<10x16xbf16>, vector<16x32xbf16>, vector<10x32xf32> -> vector<10x32xf32>
    %c0_3 = arith.constant 0 : index
    %c0_4 = arith.constant 0 : index
    %3 = vector.load %arg3[%c0_3, %c0_4] : memref<1x32xf32, #tpu.memory_space<vmem>>, vector<1x32xf32>
    %4 = vector.broadcast %3 : vector<1x32xf32> to vector<10x32xf32>
    %5 = arith.addf %2, %4 : vector<10x32xf32>
    %6 = tpu.iota {dimensions = array<i32: 1>} : vector<1x32xi32>
    %c31_i32 = arith.constant 31 : i32
    %7 = vector.broadcast %c31_i32 : i32 to vector<1x32xi32>
    %8 = arith.cmpi eq, %6, %7 : vector<1x32xi32>
    %9 = arith.extui %8 : vector<1x32xi1> to vector<1x32xi32>
    %10 = arith.sitofp %9 : vector<1x32xi32> to vector<1x32xf32>
    %c0_5 = arith.constant 0 : index
    %c0_6 = arith.constant 0 : index
    %11 = vector.load %arg4[%c0_5, %c0_6] : memref<10x1xf32, #tpu.memory_space<vmem>>, vector<10x1xf32>
    %12 = vector.broadcast %11 : vector<10x1xf32> to vector<10x32xf32>
    %13 = vector.broadcast %10 : vector<1x32xf32> to vector<10x32xf32>
    %14 = arith.mulf %12, %13 : vector<10x32xf32>
    %15 = arith.addf %5, %14 : vector<10x32xf32>
    %c0_7 = arith.constant 0 : index
    %c0_8 = arith.constant 0 : index
    %16 = vector.load %arg5[%c0_7, %c0_8] : memref<10x32xf32, #tpu.memory_space<vmem>>, vector<10x32xf32>
    tpu.vector_store %arg5[%c0_7, %c0_8], %15 {strides = array<i32>} : memref<10x32xf32, #tpu.memory_space<vmem>>, vector<10x32xf32>,
    return
  }
  func.func @transform_0(%arg0: i32) -> (i32, i32) {
    %c0_i32 = arith.constant 0 : i32
    %c0_i32_0 = arith.constant 0 : i32
    %c0_i32_1 = arith.constant 0 : i32
    return %c0_i32, %c0_i32_0 : i32, i32
  }
  func.func @transform_1(%arg0: i32) -> (i32, i32) {
    %c0_i32 = arith.constant 0 : i32
    %c0_i32_0 = arith.constant 0 : i32
    %c0_i32_1 = arith.constant 0 : i32
    return %c0_i32, %c0_i32_0 : i32, i32
  }
  func.func @transform_2(%arg0: i32) -> (i32, i32) {
    %c0_i32 = arith.constant 0 : i32
    %c0_i32_0 = arith.constant 0 : i32
    %c0_i32_1 = arith.constant 0 : i32
    return %c0_i32, %c0_i32_0 : i32, i32
  }
  func.func @transform_3(%arg0: i32) -> (i32, i32) {
    %c0_i32 = arith.constant 0 : i32
    %c0_i32_0 = arith.constant 0 : i32
    %c0_i32_1 = arith.constant 0 : i32
    return %c0_i32, %c0_i32_0 : i32, i32
  }
  func.func @transform_4(%arg0: i32) -> (i32, i32) {
    %c0_i32 = arith.constant 0 : i32
    %c0_i32_0 = arith.constant 0 : i32
    %c0_i32_1 = arith.constant 0 : i32
    return %c0_i32, %c0_i32_0 : i32, i32
  }
}

</mosaic_0001>

<llo_original>
// kernel: tpu_custom_call.1
$region0: #{tpu_custom_call.1}
  #allocation0 [shape = 'u32[]', space=smem, size = 0x4, offset = 0x4, fixed_abs, tag = 'smem constant byte address 0x4 - core index']
  #allocation1 [shape = 'u32[144,128]{1,0:T(1,128)}', space=vmem, size = 0x12000, scoped, tag = 'internal scratch']
  %s0 = inlined_call_operand.hbm [shape: bf16[10,16], index: 0, kind: input, shape index: {}]
  %s1 = inlined_call_operand.hbm [shape: bf16[16,32], index: 1, kind: input, shape index: {}]
  %s2 = inlined_call_operand.hbm [shape: f32[1,32], index: 2, kind: input, shape index: {}]
  %s3 = inlined_call_operand.hbm [shape: f32[10,1], index: 3, kind: input, shape index: {}]
  %s4 = inlined_call_operand.hbm [shape: f32[10,32], index: 4, kind: output, shape index: {}]
  %s5 = sld [smem:[#allocation0]]
  $region42: #{tpu_custom_call.1} parent=0
    _
  %s7 = ssub.s32 1, %s5
  %s8 = scalar_select 0, %s7, %s5
  $region1: #{tpu_custom_call.1} parent=0
    #allocation2 [shape = 'u8[4096]{0}', space=vmem, size = 0x1000, scoped, tag = 'input window, operand 0, single buffered']
    #allocation3 [shape = 's32[1]{0}', space=sflag, size = 0x4, scoped, tag = 'scoped memory for tpu_custom_call.1']
    #allocation4 [shape = 's32[1]{0}', space=sflag, size = 0x4, scoped, tag = 'scoped memory for tpu_custom_call.1']
    #allocation5 [shape = 'u8[4096]{0}', space=vmem, size = 0x1000, scoped, tag = 'input window, operand 1, single buffered']
    #allocation6 [shape = 's32[1]{0}', space=sflag, size = 0x4, scoped, tag = 'scoped memory for tpu_custom_call.1']
    #allocation7 [shape = 'u8[512]{0}', space=vmem, size = 0x400, scoped, tag = 'input window, operand 2, single buffered']
    #allocation8 [shape = 'u8[8192]{0}', space=vmem, size = 0x2000, scoped, tag = 'input window, operand 3, single buffered']
    #allocation9 [shape = 's32[1]{0}', space=sflag, size = 0x4, scoped, tag = 'scoped memory for tpu_custom_call.1']
    #allocation10 [shape = 'u8[8192]{0}', space=vmem, size = 0x2000, scoped, tag = 'output window, operand 0, single buffered']
    %9 = vsyncpa [#allocation3], 0
    %10 = vsyncpa [#allocation6], 0
    %11 = vsyncpa [#allocation9], 0
    %12 = vsyncpa [#allocation4], 0
    // Predicated region
    $region2: #{tpu_custom_call.1} parent=1 // pred_check
      _
    $region3: #{tpu_custom_call.1} parent=1 // pred_check_branch
      %14 = sbr.rel (0) target = $region5
    $region4: #{tpu_custom_call.1} parent=1 // pred_region
      %s16 = ssub.s32 128, 128
      %17 = vsyncadd [#allocation3], %s16
      %s18 = sshll.u32 [#allocation2], 4
      %s19 = int_to_ptr.vmem [resolvable:$true] %s18
      %24 = dma.hbm_to_vmem [thread:$0]  %s0, 128, %s19, [#allocation3], 64, 64, 4
    $region5: #{tpu_custom_call.1} parent=1 // pred_fallthru
      _
    // Predicated region
    $region6: #{tpu_custom_call.1} parent=1 // pred_check
      _
    $region7: #{tpu_custom_call.1} parent=1 // pred_check_branch
      %26 = sbr.rel (0) target = $region9
    $region8: #{tpu_custom_call.1} parent=1 // pred_region
      %s28 = ssub.s32 128, 128
      %29 = vsyncadd [#allocation6], %s28
      %s30 = sshll.u32 [#allocation5], 4
      %s31 = int_to_ptr.vmem [resolvable:$true] %s30
      %36 = dma.hbm_to_vmem [thread:$0]  %s1, 128, %s31, [#allocation6], 64, 64, 4
    $region9: #{tpu_custom_call.1} parent=1 // pred_fallthru
      _
    // Predicated region
    $region10: #{tpu_custom_call.1} parent=1 // pred_check
      _
    $region11: #{tpu_custom_call.1} parent=1 // pred_check_branch
      %38 = sbr.rel (0) target = $region13
    $region12: #{tpu_custom_call.1} parent=1 // pred_region
      %s40 = ssub.s32 16, 16
      %41 = vsyncadd [#allocation6], %s40
      %s43 = sshll.u32 [#allocation7], 4
      %s44 = int_to_ptr.vmem [resolvable:$true] %s43
      %46 = dma.hbm_to_vmem [thread:$0]  %s2, 16, %s44, [#allocation6]
    $region13: #{tpu_custom_call.1} parent=1 // pred_fallthru
      _
    // Predicated region
    $region14: #{tpu_custom_call.1} parent=1 // pred_check
      _
    $region15: #{tpu_custom_call.1} parent=1 // pred_check_branch
      %48 = sbr.rel (0) target = $region17
    $region16: #{tpu_custom_call.1} parent=1 // pred_region
      %s50 = ssub.s32 256, 256
      %51 = vsyncadd [#allocation9], %s50
      %s52 = sshll.u32 [#allocation8], 4
      %s53 = int_to_ptr.vmem [resolvable:$true] %s52
      %58 = dma.hbm_to_vmem [thread:$0]  %s3, 256, %s53, [#allocation9], 128, 128, 8
    $region17: #{tpu_custom_call.1} parent=1 // pred_fallthru
      _
    // Predicated region
    $region18: #{tpu_custom_call.1} parent=1 // pred_check
      _
    $region19: #{tpu_custom_call.1} parent=1 // pred_check_branch
      %60 = sbr.rel (0) target = $region21
    $region20: #{tpu_custom_call.1} parent=1 // pred_region
      %61 = dma.done [#allocation3], 128
    $region21: #{tpu_custom_call.1} parent=1 // pred_fallthru
      _
    // Predicated region
    $region22: #{tpu_custom_call.1} parent=1 // pred_check
      _
    $region23: #{tpu_custom_call.1} parent=1 // pred_check_branch
      %63 = sbr.rel (0) target = $region25
    $region24: #{tpu_custom_call.1} parent=1 // pred_region
      %64 = dma.done [#allocation6], 128
    $region25: #{tpu_custom_call.1} parent=1 // pred_fallthru
      _
    // Predicated region
    $region26: #{tpu_custom_call.1} parent=1 // pred_check
      _
    $region27: #{tpu_custom_call.1} parent=1 // pred_check_branch
      %66 = sbr.rel (0) target = $region29
    $region28: #{tpu_custom_call.1} parent=1 // pred_region
      %67 = dma.done [#allocation6], 16
    $region29: #{tpu_custom_call.1} parent=1 // pred_fallthru
      _
    // Predicated region
    $region30: #{tpu_custom_call.1} parent=1 // pred_check
      _
    $region31: #{tpu_custom_call.1} parent=1 // pred_check_branch
      %69 = sbr.rel (0) target = $region33
    $region32: #{tpu_custom_call.1} parent=1 // pred_region
      %70 = dma.done [#allocation9], 256
    $region33: #{tpu_custom_call.1} parent=1 // pred_fallthru
      _
    %v72 = vld [vmem:[#allocation2] sm:$0xf]
    %v73 = vld [vmem:[#allocation2 + $0x4] sm:$0x1]
    %v74 = vld [vmem:[#allocation5] sm:$0xf]
    %v75 = vld [vmem:[#allocation5 + $0x4] sm:$0xf]
    %v76 = vld [vmem:[#allocation7] sm:$0x1]
    %v78 = vlaneseq
    %v79 = vshrl.u32 %v78, 7
    %v80 = vsub.s32 0, %v79
    %v81 = vrot.slane %v76, %v80
    %v85 = vunpack.c.l.b16 %v72
    %v86 = vunpack.c.l.b16 %v73
    %v87 = vpack.c.b16 %v86, %v85
    %v90 = vunpack.c.l.b16 %v74
    %v91 = vunpack.c.l.b16 %v75
    %v92 = vpack.c.b16 %v91, %v90
    %vm94 = vcmask 130048
    %v96 = vsel %vm94, %v87, 0
    %98 = vmatprep.subr.bf16.mxu0 0
    %99 = vmatpush1.bf16.msra.mxu0 %v92
    %100 = vmatprep.subr.bf16.mxu0 0
    %101 = vmatpush1.bf16.msra.mxu0 0
    %102 = vmatprep.subr.bf16.mxu0 0
    %103 = vmatpush1.bf16.msra.mxu0 0
    %104 = vmatprep.subr.bf16.mxu0 0
    %105 = vmatpush1.bf16.msra.mxu0 0
    %106 = vmatprep.subr.bf16.mxu0 0
    %107 = vmatpush1.bf16.msra.mxu0 0
    %108 = vmatprep.subr.bf16.mxu0 0
    %109 = vmatpush1.bf16.msra.mxu0 0
    %110 = vmatprep.subr.bf16.mxu0 0
    %111 = vmatpush1.bf16.msra.mxu0 0
    %112 = vmatprep.subr.bf16.mxu0 0
    %113 = vmatpush1.bf16.msra.mxu0 0
    %114 = vmatprep.subr.bf16.mxu0 0
    %115 = vmatpush1.bf16.msra.mxu0 0
    %116 = vmatprep.subr.bf16.mxu0 0
    %117 = vmatpush1.bf16.msra.mxu0 0
    %118 = vmatprep.subr.bf16.mxu0 0
    %119 = vmatpush1.bf16.msra.mxu0 0
    %120 = vmatprep.subr.bf16.mxu0 0
    %121 = vmatpush1.bf16.msra.mxu0 0
    %122 = vmatprep.subr.bf16.mxu0 0
    %123 = vmatpush1.bf16.msra.mxu0 0
    %124 = vmatprep.subr.bf16.mxu0 0
    %125 = vmatpush1.bf16.msra.mxu0 0
    %126 = vmatprep.subr.bf16.mxu0 0
    %127 = vmatpush1.bf16.msra.mxu0 0
    %128 = vmatprep.subr.bf16.mxu0 0
    %129 = vmatpush1.bf16.msra.mxu0 0
    %130 = vmatprep.mubr.bf16.mxu0 0
    %131 = vmatmul.mubr.bf16.gmra.mrb[0].mxu0 %v96
    %v132 = vpop.f32.mrb[0].mxu0
    %v133 = vadd.f32 %v81, %v132
    %v134 = vpop.f32.mrb[0].mxu0
    %v135 = vpop.f32.mrb[0].mxu0
    %v136 = vadd.f32 %v81, %v135
    %v137 = vpop.f32.mrb[0].mxu0
    %138 = vdwg.mxu0
    %v139 = vlaneseq
    %v140 = vand.u32 %v139, 127
    %vm141 = vcmp.eq.s32.totalorder %v140, 31
    %v142 = vsel %vm141, 1, 0
    %v143 = vcvt.s32.f32 %v142
    %v144 = vld [vmem:[#allocation8] sm:$0xff]
    %v145 = vld [vmem:[#allocation8 + $0x8] sm:$0x3]
    %147 = vset.pattern.permute.xlu0 0
    %148 = vperm.xlu0 %147, %v144
    %v149 = vpop.permute.xlu0 %148
    %152 = vset.pattern.permute.xlu0 0
    %153 = vperm.xlu0 %152, %v145
    %v154 = vpop.permute.xlu0 %153
    %v156 = vmul.f32 %v149, %v143
    %v157 = vmul.f32 %v154, %v143
    %v158 = vadd.f32 %v133, %v156
    %v159 = vadd.f32 %v136, %v157
    %vm160 = vcmask 261120
    %161 = vst.msk [vmem:[#allocation10] sm:$0xff] %vm160, %v158
    %vm162 = vcmask 254976
    %163 = vst.msk [vmem:[#allocation10 + $0x8] sm:$0x3] %vm162, %v159
    // Predicated region
    $region34: #{tpu_custom_call.1} parent=1 // pred_check
      _
    $region35: #{tpu_custom_call.1} parent=1 // pred_check_branch
      %165 = sbr.rel (0) target = $region37
    $region36: #{tpu_custom_call.1} parent=1 // pred_region
      %s167 = ssub.s32 256, 256
      %168 = vsyncadd [#allocation4], %s167
      %s169 = sshll.u32 [#allocation10], 4
      %s170 = int_to_ptr.vmem [resolvable:$true] %s169
      %175 = dma.vmem_to_hbm [thread:$0]  %s170, 256, %s4, [#allocation4], 128, 128, 8
    $region37: #{tpu_custom_call.1} parent=1 // pred_fallthru
      _
    // Predicated region
    $region38: #{tpu_custom_call.1} parent=1 // pred_check
      _
    $region39: #{tpu_custom_call.1} parent=1 // pred_check_branch
      %177 = sbr.rel (0) target = $region41
    $region40: #{tpu_custom_call.1} parent=1 // pred_region
      %178 = dma.done [#allocation4], 256
    $region41: #{tpu_custom_call.1} parent=1 // pred_fallthru
      _
    %179 = vsyncpa [#allocation3], 1
    %180 = vsyncpa [#allocation6], 1
    %181 = vsyncpa [#allocation9], 1
    %182 = vsyncpa [#allocation4], 1

</llo_original>
